<compile_context>
chip_gen: v5e
topology: v5e:2x2
jax: 0.10.0
libtpu: 0.0.40
codegen_flags: <defaults>
</compile_context>

<pallas_src>
import functools
import math

import jax
import jax.numpy as jnp
from jax.experimental import pallas as pl
from jax.experimental.pallas import tpu as pltpu

_LANE = 128
_DEFAULT_TILE_BUDGET = 2 * 1024 * 1024   # bytes per VMEM buffer (in / out / carry)
_DEFAULT_VMEM_LIMIT = 32 * 1024 * 1024


# --------------------------------------------------------------------------
# sizing helpers
# --------------------------------------------------------------------------
def _sublane_unit(dtype) -> int:
    # Native sublane tiling: 8 rows for 4-byte dtypes, 16 for bf16, 32 for int8.
    itemsize = jnp.dtype(dtype).itemsize
    return max(8, 8 * (4 // max(1, itemsize)))


def _round_down(x: int, m: int) -> int:
    return (x // m) * m


def _round_up(x: int, m: int) -> int:
    return ((x + m - 1) // m) * m


def _vmem_budget():
    """(per-buffer tile byte budget, vmem_limit_bytes), generation-aware.

    The pipelined kernel keeps ~5 live tiles (double-buffered in/out + carry)
    plus a few elementwise temporaries, so budgets leave generous headroom.
    The try/except only guards the host-side hardware query (not lowering).
    """
    try:
        cap = int(pltpu.get_tpu_info().vmem_capacity_bytes)
    except Exception:
        cap = None
    if cap is None:
        return _DEFAULT_TILE_BUDGET, _DEFAULT_VMEM_LIMIT
    if cap >= 100 * 1024 * 1024:                      # v5e / v6e: 128 MiB VMEM
        return 4 * 1024 * 1024, 64 * 1024 * 1024
    return 2 * 1024 * 1024, 40 * 1024 * 1024          # v7x: 64 MiB physical VMEM


def _pick_time_tiles(batch, orig_length, length, dtype, tile_budget):
    """Choose (tm rows, tl lanes) for the time-tiled shift kernel."""
    itemsize = jnp.dtype(dtype).itemsize
    unit = _sublane_unit(dtype)
    # Input blocks reuse the output tile width, so cap tl by both extents
    # (keeps the block no larger than the input array in the lane dim).
    tl_cap = min(_round_down(length, _LANE), _round_down(orig_length, _LANE))

    if batch <= unit:
        tm = batch                       # full (sub-unit) batch: one row block
        tl = min(tl_cap,
                 max(_LANE, _round_down(tile_budget // max(1, tm * itemsize), _LANE)))
        return tm, tl

    tm = unit
    tl = min(tl_cap, max(_LANE, _round_down(tile_budget // (tm * itemsize), _LANE)))
    # If the lane cap is binding, spend leftover budget on more rows, but keep
    # >= 2 row blocks whenever the batch allows (v7x dual-TensorCore sharding).
    rows_budget = max(unit, _round_down(tile_budget // (tl * itemsize), unit))
    two_blocks = _round_up(pl.cdiv(batch, 2), unit)
    tm = max(unit, min(rows_budget, two_blocks))
    return tm, tl


# --------------------------------------------------------------------------
# kernels
# --------------------------------------------------------------------------
def _shift_kernel(x_ref, o_ref, carry_ref, *, shift, tl, r, orig_length, need_mask):
    """Time-tiled shift + zero-fill.

    At grid step j (time axis), carry_ref holds input block (q0 + j - 1) and
    x_ref holds input block (q0 + j).  Output tile t = j - 1 takes
        out[:, u] = src[u + r] from carry if u < tl - r else from x_ref,
    then zero-fills positions whose global source index is out of range.
    Step j == 0 is the carry prologue and writes nothing.
    """
    j = pl.program_id(1)

    @pl.when(j > 0)
    def _compute():
        t = j - 1
        prev = carry_ref[...]
        cur = x_ref[...]
        if r != 0 or need_mask:
            col = jax.lax.broadcasted_iota(jnp.int32, o_ref.shape, 1)
        if r == 0:
            combined = prev
        else:
            # Select then one lane rotation (VPU + XLU): no unaligned stores.
            sel = jnp.where(col >= r, prev, cur)
            combined = pltpu.roll(sel, shift=tl - r, axis=1)
        if need_mask:
            gcol = t * tl + col
            valid = (gcol >= shift) & (gcol < shift + orig_length)
            combined = jnp.where(valid, combined, 0)
        o_ref[...] = combined          # single, lane-dense full-tile store

    carry_ref[...] = x_ref[...]        # stash current block for the next step


def _shift_rows_kernel(x_ref, o_ref, *, shift, length):
    """Row-tiled fallback for clips shorter than one lane tile."""
    x = x_ref[...]
    orig = x.shape[-1]
    if shift >= 0:
        # Pad: build the padded rows in registers -> one full-tile store.
        o_ref[...] = jnp.pad(x, ((0, 0), (shift, length - shift - orig)))
    else:
        start = -shift
        o_ref[...] = x[:, start:start + length]


# --------------------------------------------------------------------------
# pallas_call wrappers
# --------------------------------------------------------------------------
def _shift_time_tiled(x2d, length, shift, *, tile_budget, vmem_limit):
    batch, orig_length = x2d.shape
    dtype = x2d.dtype
    itemsize = jnp.dtype(dtype).itemsize
    tm, tl = _pick_time_tiles(batch, orig_length, length, dtype, tile_budget)

    nm = pl.cdiv(batch, tm)
    nt = pl.cdiv(length, tl)
    nb = pl.cdiv(orig_length, tl)
    r = (-shift) % tl            # static in-tile source offset
    q0 = (-shift) // tl          # input block holding the source of output col 0

    # Trims never need the zero-fill mask (every written column has a source).
    need_mask = (shift > 0) or (shift + orig_length < length)
    kernel = functools.partial(_shift_kernel, shift=shift, tl=tl, r=r,
                               orig_length=orig_length, need_mask=need_mask)

    def in_index(i, j):
        # Out-of-range blocks are clamped; their data is only read where the
        # zero-fill mask (or the ragged output tail) discards it.
        return (i, jnp.clip(j + q0, 0, nb - 1))

    def out_index(i, j):
        # j == 0 is the carry prologue; it maps to tile 0 but writes nothing
        # (tile 0 is rewritten correctly at j == 1 before write-back).
        return (i, jnp.maximum(j - 1, 0))

    bytes_accessed = (batch * orig_length + batch * length) * itemsize
    return pl.pallas_call(
        kernel,
        out_shape=jax.ShapeDtypeStruct((batch, length), dtype),
        grid=(nm, nt + 1),
        in_specs=[pl.BlockSpec((tm, tl), in_index)],
        out_specs=pl.BlockSpec((tm, tl), out_index),
        scratch_shapes=[pltpu.VMEM((tm, tl), dtype)],
        compiler_params=pltpu.CompilerParams(
            dimension_semantics=("parallel", "arbitrary"),
            vmem_limit_bytes=vmem_limit),
        cost_estimate=pl.CostEstimate(flops=0, transcendentals=0,
                                      bytes_accessed=bytes_accessed),
    )(x2d)


def _shift_row_tiled(x2d, length, shift, *, tile_budget, vmem_limit):
    batch, orig_length = x2d.shape
    dtype = x2d.dtype
    itemsize = jnp.dtype(dtype).itemsize
    unit = _sublane_unit(dtype)
    if batch <= unit:
        tm = batch
    else:
        row_bytes = (orig_length + length) * itemsize
        tm = max(unit, _round_down((2 * tile_budget) // max(1, row_bytes), unit))
        tm = min(tm, _round_up(pl.cdiv(batch, 2), unit))   # >= 2 row blocks (v7x)

    kernel = functools.partial(_shift_rows_kernel, shift=shift, length=length)
    bytes_accessed = (batch * orig_length + batch * length) * itemsize
    return pl.pallas_call(
        kernel,
        out_shape=jax.ShapeDtypeStruct((batch, length), dtype),
        grid=(pl.cdiv(batch, tm),),
        in_specs=[pl.BlockSpec((tm, orig_length), lambda i: (i, 0))],
        out_specs=pl.BlockSpec((tm, length), lambda i: (i, 0)),
        compiler_params=pltpu.CompilerParams(
            dimension_semantics=("parallel",),
            vmem_limit_bytes=vmem_limit),
        cost_estimate=pl.CostEstimate(flops=0, transcendentals=0,
                                      bytes_accessed=bytes_accessed),
    )(x2d)


# --------------------------------------------------------------------------
# public wrapper (eval-mode WaveformSlicer.forward)
# --------------------------------------------------------------------------
def waveform_slicer(waveform: jax.Array, length: int, *, offset=None) -> jax.Array:
    """Slice / pad `waveform` of shape (*, orig_length) to (*, length).

    `offset` optionally supplies the (deterministic) training-mode offset;
    when None, the eval-mode "middle" rule is used.
    """
    orig_shape = waveform.shape
    orig_length = int(orig_shape[-1])
    lead = orig_shape[:-1]
    batch = int(math.prod(lead)) if lead else 1

    padding = length - orig_length
    if padding == 0:
        return waveform                       # identity: skip the kernel

    if padding > 0:
        shift = (padding // 2) if offset is None else int(offset)
        assert 0 <= shift <= padding
    else:
        start = ((-padding) // 2) if offset is None else int(offset)
        assert 0 <= start <= -padding
        shift = -start                        # negative shift == trim

    x2d = waveform.reshape(batch, orig_length)
    tile_budget, vmem_limit = _vmem_budget()

    if length >= _LANE and orig_length >= _LANE:
        out2d = _shift_time_tiled(x2d, length, shift,
                                  tile_budget=tile_budget, vmem_limit=vmem_limit)
    else:
        # TODO(synk): clips shorter than one lane tile (128) read whole rows;
        # padding a <128-sample clip to a very long output would want its own
        # time-tiled zero-fill path.
        out2d = _shift_row_tiled(x2d, length, shift,
                                 tile_budget=tile_budget, vmem_limit=vmem_limit)

    return out2d.reshape(*lead, length)


# --------------------------------------------------------------------------
# reference + self-test
# --------------------------------------------------------------------------
def _reference(waveform, length):
    """Pure-JAX reference of eval-mode WaveformSlicer.forward."""
    orig_length = waveform.shape[-1]
    padding = length - orig_length
    if padding > 0:
        pad_left = padding // 2
        cfg = [(0, 0)] * (waveform.ndim - 1) + [(pad_left, padding - pad_left)]
        return jnp.pad(waveform, cfg)
    if padding < 0:
        start = (-padding) // 2
        return waveform[..., start:start + length]
    return waveform


if __name__ == "__main__":
    key = jax.random.PRNGKey(0)
    keys = jax.random.split(key, 6)

    def check(x, length):
        y = waveform_slicer(x, length=length)
        jax.block_until_ready(y)
        ref = _reference(x, length)
        assert y.shape == ref.shape, (y.shape, ref.shape)
        assert jnp.allclose(y, ref), ("mismatch", x.shape, length)
        return y

    # 1) trim, short clip (row-tiled fallback): (2, 4, 20) -> (2, 4, 12)
    check(jax.random.normal(keys[0], (2, 4, 20), dtype=jnp.float32), 12)

    # 2) pad, short clip (row-tiled fallback): (2, 4, 8) -> (2, 4, 12)
    check(jax.random.normal(keys[1], (2, 4, 8), dtype=jnp.float32), 12)

    # 3) equal length: identity short-circuit (no kernel)
    x_same = jax.random.normal(keys[2], (2, 4, 20), dtype=jnp.float32)
    y_same = waveform_slicer(x_same, length=20)
    jax.block_until_ready(y_same)
    assert jnp.allclose(y_same, x_same)

    # 4) trim, time-tiled path, unaligned start (=220), 2 parallel row blocks:
    #    (16, 3000) -> (16, 2560)
    check(jax.random.normal(keys[3], (16, 3000), dtype=jnp.float32), 2560)

    # 5) pad, time-tiled path, unaligned pad_left (=12): (8, 1000) -> (8, 1024)
    check(jax.random.normal(keys[4], (8, 1000), dtype=jnp.float32), 1024)

    # 6) trim, time-tiled path with a ragged last output tile:
    #    (8, 1000) -> (8, 700), start = 150
    check(jax.random.normal(keys[5], (8, 1000), dtype=jnp.float32), 700)

    # 7) pad, time-tiled path, 3-D batch with ragged row blocks:
    #    (2, 12, 800) -> (2, 12, 1024)
    check(jax.random.normal(key, (2, 12, 800), dtype=jnp.float32), 1024)

    print("KERNEL_OK")
</pallas_src>

<mosaic_0001>
module attributes {stable_mosaic.version = 11 : i64} {
  func.func @_shift_rows_kernel(%arg0: i32, %arg1: memref<8x20xf32, #tpu.memory_space<vmem>>, %arg2: memref<8x12xf32, #tpu.memory_space<vmem>>) attributes {dimension_semantics = [#tpu.dimension_semantics<parallel>], iteration_bounds = array<i64: 1>, scalar_prefetch = 0 : i64, scratch_operands = 0 : i64, tpu.core_type = #tpu.core_type<tc>, window_params = [{transform_indices = @transform_0, window_bounds = array<i64: 8, 20>}, {transform_indices = @transform_1, window_bounds = array<i64: 8, 12>}]} {
    %c0 = arith.constant 0 : index
    %c0_0 = arith.constant 0 : index
    %0 = vector.load %arg1[%c0, %c0_0] : memref<8x20xf32, #tpu.memory_space<vmem>>, vector<8x20xf32>
    %1 = vector.extract_strided_slice %0 {offsets = [0, 4], sizes = [8, 12], strides = [1, 1]} : vector<8x20xf32> to vector<8x12xf32>
    %c0_1 = arith.constant 0 : index
    %c0_2 = arith.constant 0 : index
    %2 = vector.load %arg2[%c0_1, %c0_2] : memref<8x12xf32, #tpu.memory_space<vmem>>, vector<8x12xf32>
    tpu.vector_store %arg2[%c0_1, %c0_2], %1 {strides = array<i32>} : memref<8x12xf32, #tpu.memory_space<vmem>>, vector<8x12xf32>,
    return
  }
  func.func @transform_0(%arg0: i32) -> (i32, i32) {
    %c0_i32 = arith.constant 0 : i32
    %c0_i32_0 = arith.constant 0 : i32
    return %arg0, %c0_i32 : i32, i32
  }
  func.func @transform_1(%arg0: i32) -> (i32, i32) {
    %c0_i32 = arith.constant 0 : i32
    %c0_i32_0 = arith.constant 0 : i32
    return %arg0, %c0_i32 : i32, i32
  }
}

</mosaic_0001>

<llo_original>
// kernel: tpu_custom_call.1
$region0: #{tpu_custom_call.1}
  #allocation0 [shape = 'u32[]', space=smem, size = 0x4, offset = 0x4, fixed_abs, tag = 'smem constant byte address 0x4 - core index']
  #allocation1 [shape = 'u32[72,128]{1,0:T(1,128)}', space=vmem, size = 0x9000, scoped, tag = 'internal scratch']
  %s0 = inlined_call_operand.hbm [shape: f32[8,20], index: 0, kind: input, shape index: {}]
  %s1 = inlined_call_operand.hbm [shape: f32[8,12], index: 1, kind: output, shape index: {}]
  %s2 = sld [smem:[#allocation0]]
  $region18: #{tpu_custom_call.1} parent=0
    _
  %s4 = ssub.s32 1, %s2
  %s5 = scalar_select 0, %s4, %s2
  $region1: #{tpu_custom_call.1} parent=0
    #allocation2 [shape = 'u8[4096]{0}', space=vmem, size = 0x1000, scoped, tag = 'input window, operand 0, single buffered']
    #allocation3 [shape = 's32[1]{0}', space=sflag, size = 0x4, scoped, tag = 'scoped memory for tpu_custom_call.1']
    #allocation4 [shape = 's32[1]{0}', space=sflag, size = 0x4, scoped, tag = 'scoped memory for tpu_custom_call.1']
    #allocation5 [shape = 'u8[4096]{0}', space=vmem, size = 0x1000, scoped, tag = 'output window, operand 0, single buffered']
    %6 = vsyncpa [#allocation3], 0
    %7 = vsyncpa [#allocation4], 0
    // Predicated region
    $region2: #{tpu_custom_call.1} parent=1 // pred_check
      _
    $region3: #{tpu_custom_call.1} parent=1 // pred_check_branch
      %9 = sbr.rel (0) target = $region5
    $region4: #{tpu_custom_call.1} parent=1 // pred_region
      %11 = vsyncadd [#allocation3], 0
      %s13 = sshll.u32 %s0, 4
      %s14 = int_to_ptr.hbm [resolvable:$true] %s13
      %s15 = sshll.u32 [#allocation2], 4
      %s16 = int_to_ptr.vmem [resolvable:$true] %s15
      %18 = dma.hbm_to_vmem [thread:$0]  %s14, 128, %s16, [#allocation3]
    $region5: #{tpu_custom_call.1} parent=1 // pred_fallthru
      _
    // Predicated region
    $region6: #{tpu_custom_call.1} parent=1 // pred_check
      _
    $region7: #{tpu_custom_call.1} parent=1 // pred_check_branch
      %20 = sbr.rel (0) target = $region9
    $region8: #{tpu_custom_call.1} parent=1 // pred_region
      %22 = dma.done [#allocation3], 128
    $region9: #{tpu_custom_call.1} parent=1 // pred_fallthru
      _
    %v23 = vld [vmem:[#allocation2] sm:$0xff]
    %25 = vrot.lane.b32.xlu0 %v23, 124
    %v26 = vpop.permute.xlu0 %25
    %vm28 = vcmask 97280
    %29 = vst.msk [vmem:[#allocation5] sm:$0xff] %vm28, %v26
    // Predicated region
    $region10: #{tpu_custom_call.1} parent=1 // pred_check
      _
    $region11: #{tpu_custom_call.1} parent=1 // pred_check_branch
      %31 = sbr.rel (0) target = $region13
    $region12: #{tpu_custom_call.1} parent=1 // pred_region
      %33 = vsyncadd [#allocation4], 0
      %s35 = sshll.u32 [#allocation5], 4
      %s36 = int_to_ptr.vmem [resolvable:$true] %s35
      %s37 = sshll.u32 %s1, 4
      %s38 = int_to_ptr.hbm [resolvable:$true] %s37
      %40 = dma.vmem_to_hbm [thread:$0]  %s36, 128, %s38, [#allocation4]
    $region13: #{tpu_custom_call.1} parent=1 // pred_fallthru
      _
    // Predicated region
    $region14: #{tpu_custom_call.1} parent=1 // pred_check
      _
    $region15: #{tpu_custom_call.1} parent=1 // pred_check_branch
      %42 = sbr.rel (0) target = $region17
    $region16: #{tpu_custom_call.1} parent=1 // pred_region
      %44 = dma.done [#allocation4], 128
    $region17: #{tpu_custom_call.1} parent=1 // pred_fallthru
      _
    %45 = vsyncpa [#allocation3], 1
    %46 = vsyncpa [#allocation4], 1

</llo_original>
